<compile_context>
chip_gen: v5e
topology: v5e:2x2
jax: 0.10.0
libtpu: 0.0.40
codegen_flags: <defaults>
</compile_context>

<pallas_src>
import jax
import jax.numpy as jnp
from jax.experimental import pallas as pl
from jax.experimental.pallas import tpu as pltpu


def _bottleneck_kernel(x_ref, w1_ref, b1_ref, w2_ref, b2_ref, w3_ref, b3_ref,
                       o_ref, pad_ref):
    # x_ref: (NB, H, W, Cin); weights/biases are full arrays resident in VMEM.
    NB, H, W, Cin = x_ref.shape
    P = w1_ref.shape[1]                 # planes
    Cout = w3_ref.shape[1]              # planes * 4 (== Cin for residual add)
    cdt = w1_ref.dtype                  # matmul operand dtype (f32 or bf16)

    x = x_ref[...].astype(jnp.float32)                  # (NB, H, W, Cin)
    x2d = x.reshape(NB * H * W, Cin)                    # residual kept in f32

    # ---- conv1 (1x1, BN1 scale folded into w1) + bias + relu --------------
    h1 = jnp.dot(x2d.astype(cdt), w1_ref[...],
                 preferred_element_type=jnp.float32)
    h1 = jnp.maximum(h1 + b1_ref[...], 0.0)             # (NB*H*W, P)

    # ---- conv2 (3x3, pad=1, stride=1, BN2 scale folded) + bias + relu -----
    # Zero only the 1-element halo border (interior is fully overwritten each
    # step), then build all 9 shifted taps, concatenate along K and do ONE
    # MXU-filling matmul against w2 reshaped to (9P, P).
    pdt = pad_ref.dtype
    pad_ref[:, pl.ds(0, 1), :, :] = jnp.zeros((NB, 1, W + 2, P), pdt)
    pad_ref[:, pl.ds(H + 1, 1), :, :] = jnp.zeros((NB, 1, W + 2, P), pdt)
    pad_ref[:, :, pl.ds(0, 1), :] = jnp.zeros((NB, H + 2, 1, P), pdt)
    pad_ref[:, :, pl.ds(W + 1, 1), :] = jnp.zeros((NB, H + 2, 1, P), pdt)
    pad_ref[:, pl.ds(1, H), pl.ds(1, W), :] = (
        h1.reshape(NB, H, W, P).astype(pdt))

    taps = []
    for dy in range(3):
        for dx in range(3):
            taps.append(pad_ref[:, pl.ds(dy, H), pl.ds(dx, W), :])
    patches = jnp.concatenate(taps, axis=-1).reshape(NB * H * W, 9 * P)

    h2 = jnp.dot(patches, w2_ref[...], preferred_element_type=jnp.float32)
    h2 = jnp.maximum(h2 + b2_ref[...], 0.0)             # (NB*H*W, P)

    # ---- conv3 (1x1, BN3 scale folded) + bias + residual + relu -----------
    h3 = jnp.dot(h2.astype(cdt), w3_ref[...],
                 preferred_element_type=jnp.float32)
    out = jnp.maximum(h3 + b3_ref[...] + x2d, 0.0)      # (NB*H*W, Cout)

    o_ref[...] = out.reshape(NB, H, W, Cout).astype(o_ref.dtype)


def bottleneck_forward(x_nchw, params, *, images_per_step=1,
                       compute_dtype=jnp.float32):
    """Runs the fused Bottleneck block.

    x_nchw: (N, Cin, H, W) float32.
    params: (w1, b1, w2, b2, w3, b3) from make_params (BN scale pre-folded).
    images_per_step: how many images each grid step processes (raises matmul M).
    compute_dtype: dtype of matmul operands (jnp.float32 or jnp.bfloat16);
      accumulation, bias, ReLU and the residual add stay in f32.
    """
    N, Cin, H, W = x_nchw.shape
    w1, b1, w2, b2, w3, b3 = params
    P = w1.shape[1]
    Cout = w3.shape[1]
    assert Cout == Cin, "downsample=None requires inplanes == planes*4"
    NB = images_per_step
    assert N % NB == 0, "batch must be divisible by images_per_step"

    w1c = w1.astype(compute_dtype)
    w2c = w2.astype(compute_dtype)
    w3c = w3.astype(compute_dtype)

    x_nhwc = jnp.transpose(x_nchw, (0, 2, 3, 1))

    def full_spec(arr):
        nd = arr.ndim
        return pl.BlockSpec(arr.shape, lambda n, _nd=nd: (0,) * _nd)

    out_nhwc = pl.pallas_call(
        _bottleneck_kernel,
        out_shape=jax.ShapeDtypeStruct((N, H, W, Cout), jnp.float32),
        grid_spec=pltpu.PrefetchScalarGridSpec(
            num_scalar_prefetch=0,
            grid=(N // NB,),
            in_specs=[
                pl.BlockSpec((NB, H, W, Cin), lambda n: (n, 0, 0, 0)),  # x
                full_spec(w1c), full_spec(b1),
                full_spec(w2c), full_spec(b2),
                full_spec(w3c), full_spec(b3),
            ],
            out_specs=pl.BlockSpec((NB, H, W, Cout), lambda n: (n, 0, 0, 0)),
            scratch_shapes=[
                pltpu.VMEM((NB, H + 2, W + 2, P), compute_dtype)],
        ),
        compiler_params=pltpu.CompilerParams(
            dimension_semantics=("parallel",),
            vmem_limit_bytes=48 * 1024 * 1024),
    )(x_nhwc, w1c, b1, w2c, b2, w3c, b3)

    return jnp.transpose(out_nhwc, (0, 3, 1, 2))


def make_params(key, inplanes, planes, eps=1e-5):
    """Deterministic synthetic parameters.

    Returns kernel-layout params with eval-mode BN folded:
      * scale folded into the conv-weight columns,
      * bias kept separate (added in the kernel),
    plus PyTorch-style params for the pure-JAX reference.
    """
    expansion = 4
    outp = planes * expansion
    k = jax.random.split(key, 15)

    # PyTorch conv weights: (out, in, kh, kw).
    w1_t = jax.random.normal(k[0], (planes, inplanes, 1, 1)) * 0.1
    w2_t = jax.random.normal(k[1], (planes, planes, 3, 3)) * 0.1
    w3_t = jax.random.normal(k[2], (outp, planes, 1, 1)) * 0.1

    def bn_fold(kg, kb, km, kv, c):
        gamma = jax.random.normal(kg, (c,)) * 0.1 + 1.0
        beta = jax.random.normal(kb, (c,)) * 0.1
        mean = jax.random.normal(km, (c,)) * 0.1
        var = jax.nn.softplus(jax.random.normal(kv, (c,))) + 0.5
        scale = (gamma / jnp.sqrt(var + eps)).astype(jnp.float32)
        bias = (beta - mean * scale).astype(jnp.float32)
        return scale, bias, (gamma, beta, mean, var)

    s1, b1, bn1 = bn_fold(k[3], k[4], k[5], k[6], planes)
    s2, b2, bn2 = bn_fold(k[7], k[8], k[9], k[10], planes)
    s3, b3, bn3 = bn_fold(k[11], k[12], k[13], k[14], outp)

    # Matmul-layout weights with BN scale folded into the output columns.
    w1 = jnp.transpose(w1_t[:, :, 0, 0], (1, 0)) * s1[None, :]          # (Cin, P)
    w2 = (jnp.transpose(w2_t, (2, 3, 1, 0))                             # (kh,kw,in,out)
          .reshape(9 * planes, planes) * s2[None, :])                   # (9P, P)
    w3 = jnp.transpose(w3_t[:, :, 0, 0], (1, 0)) * s3[None, :]          # (P, 4P)

    kernel_params = (w1.astype(jnp.float32), b1.reshape(1, -1),
                     w2.astype(jnp.float32), b2.reshape(1, -1),
                     w3.astype(jnp.float32), b3.reshape(1, -1))
    torch_style = (w1_t, w2_t, w3_t, bn1, bn2, bn3, eps)
    return kernel_params, torch_style


def reference_forward(x_nchw, torch_style):
    """Pure-JAX NCHW reference matching the PyTorch forward (eval-mode BN)."""
    w1_t, w2_t, w3_t, bn1, bn2, bn3, eps = torch_style

    def conv(x, w, pad):
        return jax.lax.conv_general_dilated(
            x, w, window_strides=(1, 1), padding=[(pad, pad), (pad, pad)],
            dimension_numbers=("NCHW", "OIHW", "NCHW"))

    def bn(x, p):
        gamma, beta, mean, var = p
        g = gamma.reshape(1, -1, 1, 1)
        b = beta.reshape(1, -1, 1, 1)
        m = mean.reshape(1, -1, 1, 1)
        v = var.reshape(1, -1, 1, 1)
        return (x - m) / jnp.sqrt(v + eps) * g + b

    out = jax.nn.relu(bn(conv(x_nchw, w1_t, 0), bn1))
    out = jax.nn.relu(bn(conv(out, w2_t, 1), bn2))
    out = bn(conv(out, w3_t, 0), bn3)
    return jax.nn.relu(out + x_nchw)


if __name__ == "__main__":
    key = jax.random.PRNGKey(0)
    k_x, k_p = jax.random.split(key)

    # inplanes must equal planes*4 for the identity residual (downsample=None).
    inplanes, planes = 32, 8
    N, H, W = 2, 8, 8

    x = jax.random.normal(k_x, (N, inplanes, H, W), dtype=jnp.float32)
    kernel_params, torch_style = make_params(k_p, inplanes, planes)

    ref = jax.block_until_ready(reference_forward(x, torch_style))

    # f32 matmul operands, one image per grid step (grid length 2 keeps both
    # TensorCores of a v7x chip busy).
    out_f32 = jax.block_until_ready(
        bottleneck_forward(x, kernel_params,
                           images_per_step=1, compute_dtype=jnp.float32))
    assert out_f32.shape == (N, inplanes, H, W)
    err32 = float(jnp.max(jnp.abs(out_f32 - ref)))
    assert jnp.allclose(out_f32, ref, rtol=1e-3, atol=1e-3), \
        f"f32 max abs err {err32}"

    # bf16 matmul operands (accumulation / bias / ReLU / residual stay f32),
    # two images per grid step to raise matmul M.
    out_bf16 = jax.block_until_ready(
        bottleneck_forward(x, kernel_params,
                           images_per_step=2, compute_dtype=jnp.bfloat16))
    err16 = float(jnp.max(jnp.abs(out_bf16 - ref)))
    assert jnp.allclose(out_bf16, ref, rtol=5e-2, atol=5e-2), \
        f"bf16 max abs err {err16}"

    print("KERNEL_OK")
</pallas_src>

<mosaic_0001>
module attributes {stable_mosaic.version = 11 : i64} {
  func.func @_bottleneck_kernel(%arg0: i32, %arg1: memref<1x8x8x32xf32, #tpu.memory_space<vmem>>, %arg2: memref<32x8xf32, #tpu.memory_space<vmem>>, %arg3: memref<1x8xf32, #tpu.memory_space<vmem>>, %arg4: memref<72x8xf32, #tpu.memory_space<vmem>>, %arg5: memref<1x8xf32, #tpu.memory_space<vmem>>, %arg6: memref<8x32xf32, #tpu.memory_space<vmem>>, %arg7: memref<1x32xf32, #tpu.memory_space<vmem>>, %arg8: memref<1x8x8x32xf32, #tpu.memory_space<vmem>>, %arg9: memref<1x10x10x8xf32, #tpu.memory_space<vmem>>) attributes {dimension_semantics = [#tpu.dimension_semantics<parallel>], iteration_bounds = array<i64: 2>, scalar_prefetch = 0 : i64, scratch_operands = 1 : i64, tpu.core_type = #tpu.core_type<tc>, window_params = [{transform_indices = @transform_0, window_bounds = array<i64: 1, 8, 8, 32>}, {pipeline_mode = #tpu.pipeline_mode<synchronous>, transform_indices = @transform_1, window_bounds = array<i64: 32, 8>}, {pipeline_mode = #tpu.pipeline_mode<synchronous>, transform_indices = @transform_2, window_bounds = array<i64: 1, 8>}, {pipeline_mode = #tpu.pipeline_mode<synchronous>, transform_indices = @transform_3, window_bounds = array<i64: 72, 8>}, {pipeline_mode = #tpu.pipeline_mode<synchronous>, transform_indices = @transform_4, window_bounds = array<i64: 1, 8>}, {pipeline_mode = #tpu.pipeline_mode<synchronous>, transform_indices = @transform_5, window_bounds = array<i64: 8, 32>}, {pipeline_mode = #tpu.pipeline_mode<synchronous>, transform_indices = @transform_6, window_bounds = array<i64: 1, 32>}, {transform_indices = @transform_7, window_bounds = array<i64: 1, 8, 8, 32>}]} {
    %c0 = arith.constant 0 : index
    %c0_0 = arith.constant 0 : index
    %c0_1 = arith.constant 0 : index
    %c0_2 = arith.constant 0 : index
    %0 = vector.load %arg1[%c0, %c0_0, %c0_1, %c0_2] : memref<1x8x8x32xf32, #tpu.memory_space<vmem>>, vector<1x8x8x32xf32>
    %1 = vector.shape_cast %0 : vector<1x8x8x32xf32> to vector<64x32xf32>
    %c0_3 = arith.constant 0 : index
    %c0_4 = arith.constant 0 : index
    %2 = vector.load %arg2[%c0_3, %c0_4] : memref<32x8xf32, #tpu.memory_space<vmem>>, vector<32x8xf32>
    %cst = arith.constant dense<0.000000e+00> : vector<64x8xf32>
    %3 = tpu.matmul %1, %2, %cst {dimension_numbers = #tpu.dot_dimension_numbers<[1], [0], [0], [1], [0, 0, 1, 1], [], []>} : vector<64x32xf32>, vector<32x8xf32>, vector<64x8xf32> -> vector<64x8xf32>
    %c0_5 = arith.constant 0 : index
    %c0_6 = arith.constant 0 : index
    %4 = vector.load %arg3[%c0_5, %c0_6] : memref<1x8xf32, #tpu.memory_space<vmem>>, vector<1x8xf32>
    %5 = vector.broadcast %4 : vector<1x8xf32> to vector<64x8xf32>
    %6 = arith.addf %3, %5 : vector<64x8xf32>
    %cst_7 = arith.constant 0.000000e+00 : f32
    %7 = vector.broadcast %cst_7 : f32 to vector<64x8xf32>
    %8 = arith.maximumf %6, %7 : vector<64x8xf32>
    %cst_8 = arith.constant 0.000000e+00 : f32
    %9 = vector.broadcast %cst_8 : f32 to vector<1x1x10x8xf32>
    %c0_9 = arith.constant 0 : index
    %c0_10 = arith.constant 0 : index
    %c0_11 = arith.constant 0 : index
    %c0_12 = arith.constant 0 : index
    %10 = vector.load %arg9[%c0_9, %c0_10, %c0_11, %c0_12] : memref<1x10x10x8xf32, #tpu.memory_space<vmem>>, vector<1x1x10x8xf32>
    tpu.vector_store %arg9[%c0_9, %c0_10, %c0_11, %c0_12], %9 {strides = array<i32>} : memref<1x10x10x8xf32, #tpu.memory_space<vmem>>, vector<1x1x10x8xf32>,
    %cst_13 = arith.constant 0.000000e+00 : f32
    %11 = vector.broadcast %cst_13 : f32 to vector<1x1x10x8xf32>
    %c0_14 = arith.constant 0 : index
    %c9 = arith.constant 9 : index
    %c0_15 = arith.constant 0 : index
    %c0_16 = arith.constant 0 : index
    %12 = vector.load %arg9[%c0_14, %c9, %c0_15, %c0_16] : memref<1x10x10x8xf32, #tpu.memory_space<vmem>>, vector<1x1x10x8xf32>
    tpu.vector_store %arg9[%c0_14, %c9, %c0_15, %c0_16], %11 {strides = array<i32>} : memref<1x10x10x8xf32, #tpu.memory_space<vmem>>, vector<1x1x10x8xf32>,
    %cst_17 = arith.constant 0.000000e+00 : f32
    %13 = vector.broadcast %cst_17 : f32 to vector<1x10x1x8xf32>
    %c0_18 = arith.constant 0 : index
    %c0_19 = arith.constant 0 : index
    %c0_20 = arith.constant 0 : index
    %c0_21 = arith.constant 0 : index
    %14 = vector.load %arg9[%c0_18, %c0_19, %c0_20, %c0_21] : memref<1x10x10x8xf32, #tpu.memory_space<vmem>>, vector<1x10x1x8xf32>
    tpu.vector_store %arg9[%c0_18, %c0_19, %c0_20, %c0_21], %13 {strides = array<i32>} : memref<1x10x10x8xf32, #tpu.memory_space<vmem>>, vector<1x10x1x8xf32>,
    %cst_22 = arith.constant 0.000000e+00 : f32
    %15 = vector.broadcast %cst_22 : f32 to vector<1x10x1x8xf32>
    %c0_23 = arith.constant 0 : index
    %c0_24 = arith.constant 0 : index
    %c9_25 = arith.constant 9 : index
    %c0_26 = arith.constant 0 : index
    %16 = vector.load %arg9[%c0_23, %c0_24, %c9_25, %c0_26] : memref<1x10x10x8xf32, #tpu.memory_space<vmem>>, vector<1x10x1x8xf32>
    tpu.vector_store %arg9[%c0_23, %c0_24, %c9_25, %c0_26], %15 {strides = array<i32>} : memref<1x10x10x8xf32, #tpu.memory_space<vmem>>, vector<1x10x1x8xf32>,
    %17 = vector.shape_cast %8 : vector<64x8xf32> to vector<1x8x8x8xf32>
    %c0_27 = arith.constant 0 : index
    %c1 = arith.constant 1 : index
    %c1_28 = arith.constant 1 : index
    %c0_29 = arith.constant 0 : index
    %18 = vector.load %arg9[%c0_27, %c1, %c1_28, %c0_29] : memref<1x10x10x8xf32, #tpu.memory_space<vmem>>, vector<1x8x8x8xf32>
    tpu.vector_store %arg9[%c0_27, %c1, %c1_28, %c0_29], %17 {strides = array<i32>} : memref<1x10x10x8xf32, #tpu.memory_space<vmem>>, vector<1x8x8x8xf32>,
    %c0_30 = arith.constant 0 : index
    %c0_31 = arith.constant 0 : index
    %c0_32 = arith.constant 0 : index
    %c0_33 = arith.constant 0 : index
    %19 = vector.load %arg9[%c0_30, %c0_31, %c0_32, %c0_33] : memref<1x10x10x8xf32, #tpu.memory_space<vmem>>, vector<1x8x8x8xf32>
    %c0_34 = arith.constant 0 : index
    %c0_35 = arith.constant 0 : index
    %c1_36 = arith.constant 1 : index
    %c0_37 = arith.constant 0 : index
    %20 = vector.load %arg9[%c0_34, %c0_35, %c1_36, %c0_37] : memref<1x10x10x8xf32, #tpu.memory_space<vmem>>, vector<1x8x8x8xf32>
    %c0_38 = arith.constant 0 : index
    %c0_39 = arith.constant 0 : index
    %c2 = arith.constant 2 : index
    %c0_40 = arith.constant 0 : index
    %21 = vector.load %arg9[%c0_38, %c0_39, %c2, %c0_40] : memref<1x10x10x8xf32, #tpu.memory_space<vmem>>, vector<1x8x8x8xf32>
    %c0_41 = arith.constant 0 : index
    %c1_42 = arith.constant 1 : index
    %c0_43 = arith.constant 0 : index
    %c0_44 = arith.constant 0 : index
    %22 = vector.load %arg9[%c0_41, %c1_42, %c0_43, %c0_44] : memref<1x10x10x8xf32, #tpu.memory_space<vmem>>, vector<1x8x8x8xf32>
    %c0_45 = arith.constant 0 : index
    %c1_46 = arith.constant 1 : index
    %c1_47 = arith.constant 1 : index
    %c0_48 = arith.constant 0 : index
    %23 = vector.load %arg9[%c0_45, %c1_46, %c1_47, %c0_48] : memref<1x10x10x8xf32, #tpu.memory_space<vmem>>, vector<1x8x8x8xf32>
    %c0_49 = arith.constant 0 : index
    %c1_50 = arith.constant 1 : index
    %c2_51 = arith.constant 2 : index
    %c0_52 = arith.constant 0 : index
    %24 = vector.load %arg9[%c0_49, %c1_50, %c2_51, %c0_52] : memref<1x10x10x8xf32, #tpu.memory_space<vmem>>, vector<1x8x8x8xf32>
    %c0_53 = arith.constant 0 : index
    %c2_54 = arith.constant 2 : index
    %c0_55 = arith.constant 0 : index
    %c0_56 = arith.constant 0 : index
    %25 = vector.load %arg9[%c0_53, %c2_54, %c0_55, %c0_56] : memref<1x10x10x8xf32, #tpu.memory_space<vmem>>, vector<1x8x8x8xf32>
    %c0_57 = arith.constant 0 : index
    %c2_58 = arith.constant 2 : index
    %c1_59 = arith.constant 1 : index
    %c0_60 = arith.constant 0 : index
    %26 = vector.load %arg9[%c0_57, %c2_58, %c1_59, %c0_60] : memref<1x10x10x8xf32, #tpu.memory_space<vmem>>, vector<1x8x8x8xf32>
    %c0_61 = arith.constant 0 : index
    %c2_62 = arith.constant 2 : index
    %c2_63 = arith.constant 2 : index
    %c0_64 = arith.constant 0 : index
    %27 = vector.load %arg9[%c0_61, %c2_62, %c2_63, %c0_64] : memref<1x10x10x8xf32, #tpu.memory_space<vmem>>, vector<1x8x8x8xf32>
    %28 = tpu.concatenate %19, %20, %21, %22, %23, %24, %25, %26, %27 in 3 : vector<1x8x8x8xf32>, vector<1x8x8x8xf32>, vector<1x8x8x8xf32>, vector<1x8x8x8xf32>, vector<1x8x8x8xf32>, vector<1x8x8x8xf32>, vector<1x8x8x8xf32>, vector<1x8x8x8xf32>, vector<1x8x8x8xf32> -> vector<1x8x8x72xf32>
    %29 = vector.shape_cast %28 : vector<1x8x8x72xf32> to vector<64x72xf32>
    %c0_65 = arith.constant 0 : index
    %c0_66 = arith.constant 0 : index
    %30 = vector.load %arg4[%c0_65, %c0_66] : memref<72x8xf32, #tpu.memory_space<vmem>>, vector<72x8xf32>
    %cst_67 = arith.constant dense<0.000000e+00> : vector<64x8xf32>
    %31 = tpu.matmul %29, %30, %cst_67 {dimension_numbers = #tpu.dot_dimension_numbers<[1], [0], [0], [1], [0, 0, 1, 1], [], []>} : vector<64x72xf32>, vector<72x8xf32>, vector<64x8xf32> -> vector<64x8xf32>
    %c0_68 = arith.constant 0 : index
    %c0_69 = arith.constant 0 : index
    %32 = vector.load %arg5[%c0_68, %c0_69] : memref<1x8xf32, #tpu.memory_space<vmem>>, vector<1x8xf32>
    %33 = vector.broadcast %32 : vector<1x8xf32> to vector<64x8xf32>
    %34 = arith.addf %31, %33 : vector<64x8xf32>
    %cst_70 = arith.constant 0.000000e+00 : f32
    %35 = vector.broadcast %cst_70 : f32 to vector<64x8xf32>
    %36 = arith.maximumf %34, %35 : vector<64x8xf32>
    %c0_71 = arith.constant 0 : index
    %c0_72 = arith.constant 0 : index
    %37 = vector.load %arg6[%c0_71, %c0_72] : memref<8x32xf32, #tpu.memory_space<vmem>>, vector<8x32xf32>
    %cst_73 = arith.constant dense<0.000000e+00> : vector<64x32xf32>
    %38 = tpu.matmul %36, %37, %cst_73 {dimension_numbers = #tpu.dot_dimension_numbers<[1], [0], [0], [1], [0, 0, 1, 1], [], []>} : vector<64x8xf32>, vector<8x32xf32>, vector<64x32xf32> -> vector<64x32xf32>
    %c0_74 = arith.constant 0 : index
    %c0_75 = arith.constant 0 : index
    %39 = vector.load %arg7[%c0_74, %c0_75] : memref<1x32xf32, #tpu.memory_space<vmem>>, vector<1x32xf32>
    %40 = vector.broadcast %39 : vector<1x32xf32> to vector<64x32xf32>
    %41 = arith.addf %38, %40 : vector<64x32xf32>
    %42 = arith.addf %41, %1 : vector<64x32xf32>
    %cst_76 = arith.constant 0.000000e+00 : f32
    %43 = vector.broadcast %cst_76 : f32 to vector<64x32xf32>
    %44 = arith.maximumf %42, %43 : vector<64x32xf32>
    %45 = vector.shape_cast %44 : vector<64x32xf32> to vector<1x8x8x32xf32>
    %c0_77 = arith.constant 0 : index
    %c0_78 = arith.constant 0 : index
    %c0_79 = arith.constant 0 : index
    %c0_80 = arith.constant 0 : index
    %46 = vector.load %arg8[%c0_77, %c0_78, %c0_79, %c0_80] : memref<1x8x8x32xf32, #tpu.memory_space<vmem>>, vector<1x8x8x32xf32>
    tpu.vector_store %arg8[%c0_77, %c0_78, %c0_79, %c0_80], %45 {strides = array<i32>} : memref<1x8x8x32xf32, #tpu.memory_space<vmem>>, vector<1x8x8x32xf32>,
    return
  }
  func.func @transform_0(%arg0: i32) -> (i32, i32, i32, i32) {
    %c0_i32 = arith.constant 0 : i32
    %c0_i32_0 = arith.constant 0 : i32
    %c0_i32_1 = arith.constant 0 : i32
    %c0_i32_2 = arith.constant 0 : i32
    return %arg0, %c0_i32, %c0_i32_0, %c0_i32_1 : i32, i32, i32, i32
  }
  func.func @transform_1(%arg0: i32) -> (i32, i32) {
    %c0_i32 = arith.constant 0 : i32
    %c0_i32_0 = arith.constant 0 : i32
    %c0_i32_1 = arith.constant 0 : i32
    return %c0_i32, %c0_i32_0 : i32, i32
  }
  func.func @transform_2(%arg0: i32) -> (i32, i32) {
    %c0_i32 = arith.constant 0 : i32
    %c0_i32_0 = arith.constant 0 : i32
    %c0_i32_1 = arith.constant 0 : i32
    return %c0_i32, %c0_i32_0 : i32, i32
  }
  func.func @transform_3(%arg0: i32) -> (i32, i32) {
    %c0_i32 = arith.constant 0 : i32
    %c0_i32_0 = arith.constant 0 : i32
    %c0_i32_1 = arith.constant 0 : i32
    return %c0_i32, %c0_i32_0 : i32, i32
  }
  func.func @transform_4(%arg0: i32) -> (i32, i32) {
    %c0_i32 = arith.constant 0 : i32
    %c0_i32_0 = arith.constant 0 : i32
    %c0_i32_1 = arith.constant 0 : i32
    return %c0_i32, %c0_i32_0 : i32, i32
  }
  func.func @transform_5(%arg0: i32) -> (i32, i32) {
    %c0_i32 = arith.constant 0 : i32
    %c0_i32_0 = arith.constant 0 : i32
    %c0_i32_1 = arith.constant 0 : i32
    return %c0_i32, %c0_i32_0 : i32, i32
  }
  func.func @transform_6(%arg0: i32) -> (i32, i32) {
    %c0_i32 = arith.constant 0 : i32
    %c0_i32_0 = arith.constant 0 : i32
    %c0_i32_1 = arith.constant 0 : i32
    return %c0_i32, %c0_i32_0 : i32, i32
  }
  func.func @transform_7(%arg0: i32) -> (i32, i32, i32, i32) {
    %c0_i32 = arith.constant 0 : i32
    %c0_i32_0 = arith.constant 0 : i32
    %c0_i32_1 = arith.constant 0 : i32
    %c0_i32_2 = arith.constant 0 : i32
    return %arg0, %c0_i32, %c0_i32_0, %c0_i32_1 : i32, i32, i32, i32
  }
}

</mosaic_0001>

<llo_original>
// kernel: tpu_custom_call.1
$region0: #{tpu_custom_call.1}
  #allocation0 [shape = 'u32[]', space=smem, size = 0x4, offset = 0x4, fixed_abs, tag = 'smem constant byte address 0x4 - core index']
  #allocation1 [shape = 'u32[72,128]{1,0:T(1,128)}', space=vmem, size = 0x9000, scoped, tag = 'internal scratch']
  #allocation2 [shape = 'f32[1,10,10,8]{3,2,1,0:T(8,128)}', space=vmem, size = 0x14000, scoped, tag = 'scratch operand']
  %s0 = inlined_call_operand.hbm [shape: f32[2,8,8,32], index: 0, kind: input, shape index: {}]
  %s1 = inlined_call_operand.vmem [shape: f32[32,8], index: 1, kind: input, shape index: {}]
  %s2 = inlined_call_operand.vmem [shape: f32[1,8], index: 2, kind: input, shape index: {}]
  %s3 = inlined_call_operand.vmem [shape: f32[72,8], index: 3, kind: input, shape index: {}]
  %s4 = inlined_call_operand.vmem [shape: f32[1,8], index: 4, kind: input, shape index: {}]
  %s5 = inlined_call_operand.vmem [shape: f32[8,32], index: 5, kind: input, shape index: {}]
  %s6 = inlined_call_operand.vmem [shape: f32[1,32], index: 6, kind: input, shape index: {}]
  %s7 = inlined_call_operand.hbm [shape: f32[2,8,8,32], index: 7, kind: output, shape index: {}]
  %s8 = sld [smem:[#allocation0]]
  $region65: #{tpu_custom_call.1} parent=0
    _
  %s10 = ssub.s32 1, %s8
  %s11 = scalar_select 0, %s10, %s8
  $region1: #{tpu_custom_call.1} parent=0
    #allocation3 [shape = 'u8[65536]{0}', space=vmem, size = 0x10000, scoped, tag = 'input window, operand 0']
    #allocation4 [shape = 's32[2]{0}', space=sflag, size = 0x8, scoped, tag = 'scoped memory for tpu_custom_call.1']
    #allocation5 [shape = 's32[2]{0}', space=sflag, size = 0x8, scoped, tag = 'scoped memory for tpu_custom_call.1']
    #allocation6 [shape = 'u8[65536]{0}', space=vmem, size = 0x10000, scoped, tag = 'output window, operand 0']
    %12 = vsyncpa [#allocation4], 0
    %s13 = scalar_lea.sflag [#allocation4], 1
    %14 = vsyncpa %s13, 0
    %15 = vsyncpa [#allocation5], 0
    %s16 = scalar_lea.sflag [#allocation5], 1
    %17 = vsyncpa %s16, 0
    loop: start=0, step=1, limit=4
    $region2: #{tpu_custom_call.1} parent=1 // loop_pre_header
      _
    $region3: #{tpu_custom_call.1} parent=1 // loop_header
      %s19 = sphi 0, %s23
      %p20 = scmp.ge.s32.totalorder %s19, 4
      %s29 = sphi 0, %s31
      %s32 = sphi 0, %s29
      %s33 = sphi 0, %s32
      %s49 = sphi 0, %s33
      %s53 = sphi 0, %s53
      %s55 = sphi 0, %s53
      %s56 = sphi 0, %s55
      %s70 = sphi 0, %s56
      %s74 = sphi 0, %s74
      %s76 = sphi 0, %s74
      %s77 = sphi 0, %s76
      %s91 = sphi 0, %s77
      %s95 = sphi 0, %s95
      %s97 = sphi 0, %s95
      %s98 = sphi 0, %s97
      %s112 = sphi 0, %s98
      %s116 = sphi 0, %s116
      %s118 = sphi 0, %s116
      %s119 = sphi 0, %s118
      %s133 = sphi 0, %s119
      %s137 = sphi 0, %s137
      %s139 = sphi 0, %s137
      %s140 = sphi 0, %s139
      %s154 = sphi 0, %s140
      %s158 = sphi 0, %s158
      %s160 = sphi 0, %s158
      %s161 = sphi 0, %s160
      %s175 = sphi 0, %s161
      %s181 = sphi 0, %s183
      %s184 = sphi 0, %s181
      %s185 = sphi 0, %s184
      %s201 = sphi 0, %s185
    $region4: #{tpu_custom_call.1} parent=1 // loop_header_branch
      %22 = sbr.rel (%p20) target = $region8
    $region5: #{tpu_custom_call.1} parent=1 // loop_body
      %s24 = ssub.s32 %s19, 1
      %s25 = ssub.s32 %s19, 2
      %s26 = sadd.s32 %s19, 1
      %s27 = ssub.s32 %s19, %s26
      %p28 = scmp.eq.s32.totalorder %s27, 0
      %s30 = sadd.s32 %s29, 1
      %s31 = scalar_select %p28, %s29, %s30
      %p34 = pneg %p28
      %p35 = scmp.eq.s32.totalorder %s19, 1
      %p36 = por %p34, %p35
      %p37 = scmp.ne.s32.totalorder %s29, %s32
      %p38 = scmp.eq.s32.totalorder %s19, 0
      %p39 = por %p37, %p38
      %p40 = scmp.ne.s32.totalorder %s29, %s32
      %p41 = scmp.eq.s32.totalorder %s24, 1
      %p42 = por %p40, %p41
      %p43 = scmp.ne.s32.totalorder %s32, %s33
      %p44 = scmp.eq.s32.totalorder %s24, 0
      %p45 = por %p43, %p44
      %p46 = scmp.ne.s32.totalorder %s32, %s33
      %p47 = scmp.eq.s32.totalorder %s25, 1
      %p48 = por %p46, %p47
      %p50 = scmp.ne.s32.totalorder %s33, %s49
      %p51 = scmp.eq.s32.totalorder %s25, 0
      %p52 = por %p50, %p51
      %s54 = sadd.s32 %s53, 1
      %p57 = scmp.eq.s32.totalorder %s19, 1
      %p58 = scmp.ne.s32.totalorder %s53, %s55
      %p59 = scmp.eq.s32.totalorder %s19, 0
      %p60 = por %p58, %p59
      %p61 = scmp.ne.s32.totalorder %s53, %s55
      %p62 = scmp.eq.s32.totalorder %s24, 1
      %p63 = por %p61, %p62
      %p64 = scmp.ne.s32.totalorder %s55, %s56
      %p65 = scmp.eq.s32.totalorder %s24, 0
      %p66 = por %p64, %p65
      %p67 = scmp.ne.s32.totalorder %s55, %s56
      %p68 = scmp.eq.s32.totalorder %s25, 1
      %p69 = por %p67, %p68
      %p71 = scmp.ne.s32.totalorder %s56, %s70
      %p72 = scmp.eq.s32.totalorder %s25, 0
      %p73 = por %p71, %p72
      %s75 = sadd.s32 %s74, 1
      %p78 = scmp.eq.s32.totalorder %s19, 1
      %p79 = scmp.ne.s32.totalorder %s74, %s76
      %p80 = scmp.eq.s32.totalorder %s19, 0
      %p81 = por %p79, %p80
      %p82 = scmp.ne.s32.totalorder %s74, %s76
      %p83 = scmp.eq.s32.totalorder %s24, 1
      %p84 = por %p82, %p83
      %p85 = scmp.ne.s32.totalorder %s76, %s77
      %p86 = scmp.eq.s32.totalorder %s24, 0
      %p87 = por %p85, %p86
      %p88 = scmp.ne.s32.totalorder %s76, %s77
      %p89 = scmp.eq.s32.totalorder %s25, 1
      %p90 = por %p88, %p89
      %p92 = scmp.ne.s32.totalorder %s77, %s91
      %p93 = scmp.eq.s32.totalorder %s25, 0
      %p94 = por %p92, %p93
      %s96 = sadd.s32 %s95, 1
      %p99 = scmp.eq.s32.totalorder %s19, 1
      %p100 = scmp.ne.s32.totalorder %s95, %s97
      %p101 = scmp.eq.s32.totalorder %s19, 0
      %p102 = por %p100, %p101
      %p103 = scmp.ne.s32.totalorder %s95, %s97
      %p104 = scmp.eq.s32.totalorder %s24, 1
      %p105 = por %p103, %p104
      %p106 = scmp.ne.s32.totalorder %s97, %s98
      %p107 = scmp.eq.s32.totalorder %s24, 0
      %p108 = por %p106, %p107
      %p109 = scmp.ne.s32.totalorder %s97, %s98
      %p110 = scmp.eq.s32.totalorder %s25, 1
      %p111 = por %p109, %p110
      %p113 = scmp.ne.s32.totalorder %s98, %s112
      %p114 = scmp.eq.s32.totalorder %s25, 0
      %p115 = por %p113, %p114
      %s117 = sadd.s32 %s116, 1
      %p120 = scmp.eq.s32.totalorder %s19, 1
      %p121 = scmp.ne.s32.totalorder %s116, %s118
      %p122 = scmp.eq.s32.totalorder %s19, 0
      %p123 = por %p121, %p122
      %p124 = scmp.ne.s32.totalorder %s116, %s118
      %p125 = scmp.eq.s32.totalorder %s24, 1
      %p126 = por %p124, %p125
      %p127 = scmp.ne.s32.totalorder %s118, %s119
      %p128 = scmp.eq.s32.totalorder %s24, 0
      %p129 = por %p127, %p128
      %p130 = scmp.ne.s32.totalorder %s118, %s119
      %p131 = scmp.eq.s32.totalorder %s25, 1
      %p132 = por %p130, %p131
      %p134 = scmp.ne.s32.totalorder %s119, %s133
      %p135 = scmp.eq.s32.totalorder %s25, 0
      %p136 = por %p134, %p135
      %s138 = sadd.s32 %s137, 1
      %p141 = scmp.eq.s32.totalorder %s19, 1
      %p142 = scmp.ne.s32.totalorder %s137, %s139
      %p143 = scmp.eq.s32.totalorder %s19, 0
      %p144 = por %p142, %p143
      %p145 = scmp.ne.s32.totalorder %s137, %s139
      %p146 = scmp.eq.s32.totalorder %s24, 1
      %p147 = por %p145, %p146
      %p148 = scmp.ne.s32.totalorder %s139, %s140
      %p149 = scmp.eq.s32.totalorder %s24, 0
      %p150 = por %p148, %p149
      %p151 = scmp.ne.s32.totalorder %s139, %s140
      %p152 = scmp.eq.s32.totalorder %s25, 1
      %p153 = por %p151, %p152
      %p155 = scmp.ne.s32.totalorder %s140, %s154
      %p156 = scmp.eq.s32.totalorder %s25, 0
      %p157 = por %p155, %p156
      %s159 = sadd.s32 %s158, 1
      %p162 = scmp.eq.s32.totalorder %s19, 1
      %p163 = scmp.ne.s32.totalorder %s158, %s160
      %p164 = scmp.eq.s32.totalorder %s19, 0
      %p165 = por %p163, %p164
      %p166 = scmp.ne.s32.totalorder %s158, %s160
      %p167 = scmp.eq.s32.totalorder %s24, 1
      %p168 = por %p166, %p167
      %p169 = scmp.ne.s32.totalorder %s160, %s161
      %p170 = scmp.eq.s32.totalorder %s24, 0
      %p171 = por %p169, %p170
      %p172 = scmp.ne.s32.totalorder %s160, %s161
      %p173 = scmp.eq.s32.totalorder %s25, 1
      %p174 = por %p172, %p173
      %p176 = scmp.ne.s32.totalorder %s161, %s175
      %p177 = scmp.eq.s32.totalorder %s25, 0
      %p178 = por %p176, %p177
      %s179 = ssub.s32 %s19, %s26
      %p180 = scmp.eq.s32.totalorder %s179, 0
      %s182 = sadd.s32 %s181, 1
      %s183 = scalar_select %p180, %s181, %s182
      %p186 = pneg %p180
      %p187 = scmp.eq.s32.totalorder %s19, 1
      %p188 = por %p186, %p187
      %p189 = scmp.ne.s32.totalorder %s181, %s184
      %p190 = scmp.eq.s32.totalorder %s19, 0
      %p191 = por %p189, %p190
      %p192 = scmp.ne.s32.totalorder %s181, %s184
      %p193 = scmp.eq.s32.totalorder %s24, 1
      %p194 = por %p192, %p193
      %p195 = scmp.ne.s32.totalorder %s184, %s185
      %p196 = scmp.eq.s32.totalorder %s24, 0
      %p197 = por %p195, %p196
      %p198 = scmp.ne.s32.totalorder %s184, %s185
      %p199 = scmp.eq.s32.totalorder %s25, 1
      %p200 = por %p198, %p199
      %p202 = scmp.ne.s32.totalorder %s185, %s201
      %p203 = scmp.eq.s32.totalorder %s25, 0
      %p204 = por %p202, %p203
      %p205 = scmp.le.s32.totalorder 1, %s19
      %p206 = scmp.lt.s32.totalorder %s19, 3
      %p207 = pnand %p205, %p206
      %p208 = pneg %p207
      // Predicated region
      $region9: #{tpu_custom_call.1} parent=5 // pred_check
        _
      $region10: #{tpu_custom_call.1} parent=5 // pred_check_branch
        %210 = sbr.rel (%p207) target = $region12
      $region11: #{tpu_custom_call.1} parent=5 // pred_region
        %s211 = ssub.s32 %s19, 1
        // Predicated region
        $region13: #{tpu_custom_call.1} parent=11 // pred_check
          %p212 = pneg %p66
        $region14: #{tpu_custom_call.1} parent=11 // pred_check_branch
          %214 = sbr.rel (%p212) target = $region16
        $region15: #{tpu_custom_call.1} parent=11 // pred_region
          _
        $region16: #{tpu_custom_call.1} parent=11 // pred_fallthru
          _
        // Predicated region
        $region17: #{tpu_custom_call.1} parent=11 // pred_check
          %p215 = pneg %p87
        $region18: #{tpu_custom_call.1} parent=11 // pred_check_branch
          %217 = sbr.rel (%p215) target = $region20
        $region19: #{tpu_custom_call.1} parent=11 // pred_region
          _
        $region20: #{tpu_custom_call.1} parent=11 // pred_fallthru
          _
        // Predicated region
        $region21: #{tpu_custom_call.1} parent=11 // pred_check
          %p218 = pneg %p108
        $region22: #{tpu_custom_call.1} parent=11 // pred_check_branch
          %220 = sbr.rel (%p218) target = $region24
        $region23: #{tpu_custom_call.1} parent=11 // pred_region
          _
        $region24: #{tpu_custom_call.1} parent=11 // pred_fallthru
          _
        // Predicated region
        $region25: #{tpu_custom_call.1} parent=11 // pred_check
          %p221 = pneg %p129
        $region26: #{tpu_custom_call.1} parent=11 // pred_check_branch
          %223 = sbr.rel (%p221) target = $region28
        $region27: #{tpu_custom_call.1} parent=11 // pred_region
          _
        $region28: #{tpu_custom_call.1} parent=11 // pred_fallthru
          _
        // Predicated region
        $region29: #{tpu_custom_call.1} parent=11 // pred_check
          %p224 = pneg %p150
        $region30: #{tpu_custom_call.1} parent=11 // pred_check_branch
          %226 = sbr.rel (%p224) target = $region32
        $region31: #{tpu_custom_call.1} parent=11 // pred_region
          _
        $region32: #{tpu_custom_call.1} parent=11 // pred_fallthru
          _
        // Predicated region
        $region33: #{tpu_custom_call.1} parent=11 // pred_check
          %p227 = pneg %p171
        $region34: #{tpu_custom_call.1} parent=11 // pred_check_branch
          %229 = sbr.rel (%p227) target = $region36
        $region35: #{tpu_custom_call.1} parent=11 // pred_region
          _
        $region36: #{tpu_custom_call.1} parent=11 // pred_fallthru
          _
      $region12: #{tpu_custom_call.1} parent=5 // pred_fallthru
        _
      %p230 = scmp.lt.s32.totalorder %s19, 2
      // Predicated region
      $region37: #{tpu_custom_call.1} parent=5 // pred_check
        %p231 = pneg %p230
      $region38: #{tpu_custom_call.1} parent=5 // pred_check_branch
        %233 = sbr.rel (%p231) target = $region40
      $region39: #{tpu_custom_call.1} parent=5 // pred_region
        // Predicated region
        $region41: #{tpu_custom_call.1} parent=39 // pred_check
          %p234 = pneg %p39
        $region42: #{tpu_custom_call.1} parent=39 // pred_check_branch
          %236 = sbr.rel (%p234) target = $region44
        $region43: #{tpu_custom_call.1} parent=39 // pred_region
          %s237 = sand.u32 %s29, 1
          %s238 = scalar_lea.sflag [#allocation4], %s237
          %s239 = sand.u32 %s29, 1
          %s240 = smul.addr %s239, 64
          %s241 = scalar_lea.vmem [#allocation3], %s240
          %243 = vsyncadd %s238, 0
          %s244 = smul.addr %s19, 8
          %s245 = smul.addr %s244, 8
          %s246 = scalar_lea.hbm %s0, %s245
          %s247 = sshll.u32 %s246, 4
          %s248 = int_to_ptr.hbm [resolvable:$true] %s247
          %s249 = sshll.u32 %s241, 4
          %s250 = int_to_ptr.vmem [resolvable:$true] %s249
          %255 = dma.hbm_to_vmem [thread:$0]  %s248, 1024, %s250, %s238, 128, 128, 8
        $region44: #{tpu_custom_call.1} parent=39 // pred_fallthru
          _
      $region40: #{tpu_custom_call.1} parent=5 // pred_fallthru
        _
      %p256 = scmp.le.s32.totalorder 1, %s19
      %p257 = scmp.lt.s32.totalorder %s19, 3
      %p258 = pnand %p256, %p257
      %p259 = pneg %p258
      // Predicated region
      $region45: #{tpu_custom_call.1} parent=5 // pred_check
        _
      $region46: #{tpu_custom_call.1} parent=5 // pred_check_branch
        %261 = sbr.rel (%p258) target = $region48
      $region47: #{tpu_custom_call.1} parent=5 // pred_region
        %s262 = ssub.s32 %s19, 1
        %s263 = sand.u32 %s32, 1
        %s264 = scalar_lea.sflag [#allocation4], %s263
        %s265 = sand.u32 %s32, 1
        %s266 = smul.addr %s265, 64
        %s267 = scalar_lea.vmem [#allocation3], %s266
        // Predicated region
        $region49: #{tpu_custom_call.1} parent=47 // pred_check
          %p268 = pneg %p45
        $region50: #{tpu_custom_call.1} parent=47 // pred_check_branch
          %270 = sbr.rel (%p268) target = $region52
        $region51: #{tpu_custom_call.1} parent=47 // pred_region
          %272 = dma.done %s264, 1024
        $region52: #{tpu_custom_call.1} parent=47 // pred_fallthru
          _
        %s273 = sand.u32 %s32, 1
        %s274 = scalar_lea.sflag [#allocation4], %s273
        %s275 = sand.u32 %s32, 1
        %s276 = smul.addr %s275, 64
        %s277 = scalar_lea.vmem [#allocation3], %s276
        %p278 = pneg %p45
        %p279 = pneg %p42
        %p280 = pneg %p66
        %p281 = pneg %p63
        %p282 = pneg %p87
        %p283 = pneg %p84
        %p284 = pneg %p108
        %p285 = pneg %p105
        %p286 = pneg %p129
        %p287 = pneg %p126
        %p288 = pneg %p150
        %p289 = pneg %p147
        %p290 = pneg %p171
        %p291 = pneg %p168
        %p292 = pneg %p197
        %p293 = pneg %p194
        %s294 = sand.u32 %s184, 1
        %s295 = scalar_lea.sflag [#allocation5], %s294
        %s296 = sand.u32 %s184, 1
        %s297 = smul.addr %s296, 64
        %s298 = scalar_lea.vmem [#allocation6], %s297
        %v299 = vld [vmem:[%s267] sm:$0xff]
        %v300 = vld [vmem:[%s267 + $0x8] sm:$0xff]
        %v301 = vld [vmem:[%s267 + $0x10] sm:$0xff]
        %v302 = vld [vmem:[%s267 + $0x18] sm:$0xff]
        %v303 = vld [vmem:[%s267 + $0x20] sm:$0xff]
        %v304 = vld [vmem:[%s267 + $0x28] sm:$0xff]
        %v305 = vld [vmem:[%s267 + $0x30] sm:$0xff]
        %v306 = vld [vmem:[%s267 + $0x38] sm:$0xff]
        %v307 = vld [vmem:[%s1] sm:$0xff]
        %v308 = vld [vmem:[%s1 + $0x8] sm:$0xff]
        %v309 = vld [vmem:[%s1 + $0x10] sm:$0xff]
        %v310 = vld [vmem:[%s1 + $0x18] sm:$0xff]
        %v311 = vld [vmem:[%s2] sm:$0x1]
        %v313 = vperm.slane %v311, 0
        %vm315 = vcmask 261120
        %v317 = vsel %vm315, %v299, 0
        %v320 = vsel %vm315, %v300, 0
        %v323 = vsel %vm315, %v301, 0
        %v326 = vsel %vm315, %v302, 0
        %v329 = vsel %vm315, %v303, 0
        %v332 = vsel %vm315, %v304, 0
        %v335 = vsel %vm315, %v305, 0
        %v338 = vsel %vm315, %v306, 0
        %340 = vmatpush.msra.mxu0 0.0
        %341 = vmatpush.msra.mxu0 0.0
        %342 = vmatpush.msra.mxu0 0.0
        %343 = vmatpush.msra.mxu0 0.0
        %344 = vmatpush.msra.mxu0 0.0
        %345 = vmatpush.msra.mxu0 0.0
        %346 = vmatpush.msra.mxu0 0.0
        %347 = vmatpush.msra.mxu0 0.0
        %348 = vmatpush.msra.mxu0 0.0
        %349 = vmatpush.msra.mxu0 0.0
        %350 = vmatpush.msra.mxu0 0.0
        %351 = vmatpush.msra.mxu0 0.0
        %352 = vmatpush.msra.mxu0 %v310
        %353 = vmatpush.msra.mxu0 %v309
        %354 = vmatpush.msra.mxu0 %v308
        %355 = vmatpush.msra.mxu0 %v307
        %356 = vmatmul.f32.gmra.mxu0 %v317
        %v357 = vpop.f32.mrf.mxu0
        %v358 = vadd.f32 %v313, %v357
        %359 = vmatmul.f32.gmra.mxu0 %v320
        %v360 = vpop.f32.mrf.mxu0
        %v361 = vadd.f32 %v313, %v360
        %362 = vmatmul.f32.gmra.mxu0 %v323
        %v363 = vpop.f32.mrf.mxu0
        %v364 = vadd.f32 %v313, %v363
        %365 = vmatmul.f32.gmra.mxu0 %v326
        %v366 = vpop.f32.mrf.mxu0
        %v367 = vadd.f32 %v313, %v366
        %368 = vmatmul.f32.gmra.mxu0 %v329
        %v369 = vpop.f32.mrf.mxu0
        %v370 = vadd.f32 %v313, %v369
        %371 = vmatmul.f32.gmra.mxu0 %v332
        %v372 = vpop.f32.mrf.mxu0
        %v373 = vadd.f32 %v313, %v372
        %374 = vmatmul.f32.gmra.mxu0 %v335
        %v375 = vpop.f32.mrf.mxu0
        %v376 = vadd.f32 %v313, %v375
        %377 = vmatmul.f32.gmra.mxu0 %v338
        %v378 = vpop.f32.mrf.mxu0
        %v379 = vadd.f32 %v313, %v378
        %380 = vdwg.mxu0
        %v381 = vmax.f32 %v358, 0.0
        %v382 = vmax.f32 %v361, 0.0
        %v383 = vmax.f32 %v364, 0.0
        %v384 = vmax.f32 %v367, 0.0
        %v385 = vmax.f32 %v370, 0.0
        %v386 = vmax.f32 %v373, 0.0
        %v387 = vmax.f32 %v376, 0.0
        %v388 = vmax.f32 %v379, 0.0
        %vm389 = vcmask 64512
        %390 = vst.msk [vmem:[#allocation2] sm:$0xff] %vm389, 0.0
        %vm391 = vcmask 58368
        %392 = vst.msk [vmem:[#allocation2 + $0x8] sm:$0x3] %vm391, 0.0
        %s393 = scalar_lea.vmem [#allocation2], 144
        %394 = vst.msk [vmem:[%s393] sm:$0xff] %vm389, 0.0
        %395 = vst.msk [vmem:[%s393 + $0x8] sm:$0x3] %vm391, 0.0
        %vm396 = vcmask 57344
        %397 = vst.msk [vmem:[#allocation2] sm:$0x1] %vm396, 0.0
        %398 = vst.msk [vmem:[#allocation2 + $0x10] sm:$0x1] %vm396, 0.0
        %399 = vst.msk [vmem:[#allocation2 + $0x20] sm:$0x1] %vm396, 0.0
        %400 = vst.msk [vmem:[#allocation2 + $0x30] sm:$0x1] %vm396, 0.0
        %401 = vst.msk [vmem:[#allocation2 + $0x40] sm:$0x1] %vm396, 0.0
        %402 = vst.msk [vmem:[#allocation2 + $0x50] sm:$0x1] %vm396, 0.0
        %403 = vst.msk [vmem:[#allocation2 + $0x60] sm:$0x1] %vm396, 0.0
        %404 = vst.msk [vmem:[#allocation2 + $0x70] sm:$0x1] %vm396, 0.0
        %405 = vst.msk [vmem:[#allocation2 + $0x80] sm:$0x1] %vm396, 0.0
        %406 = vst.msk [vmem:[#allocation2 + $0x90] sm:$0x1] %vm396, 0.0
        %407 = vst.msk [vmem:[#allocation2 + $0x9] sm:$0x1] %vm396, 0.0
        %408 = vst.msk [vmem:[#allocation2 + $0x19] sm:$0x1] %vm396, 0.0
        %409 = vst.msk [vmem:[#allocation2 + $0x29] sm:$0x1] %vm396, 0.0
        %410 = vst.msk [vmem:[#allocation2 + $0x39] sm:$0x1] %vm396, 0.0
        %411 = vst.msk [vmem:[#allocation2 + $0x49] sm:$0x1] %vm396, 0.0
        %412 = vst.msk [vmem:[#allocation2 + $0x59] sm:$0x1] %vm396, 0.0
        %413 = vst.msk [vmem:[#allocation2 + $0x69] sm:$0x1] %vm396, 0.0
        %414 = vst.msk [vmem:[#allocation2 + $0x79] sm:$0x1] %vm396, 0.0
        %415 = vst.msk [vmem:[#allocation2 + $0x89] sm:$0x1] %vm396, 0.0
        %416 = vst.msk [vmem:[#allocation2 + $0x99] sm:$0x1] %vm396, 0.0
        %s417 = scalar_lea.vmem [#allocation2], 16
        %418 = vst.msk [vmem:[%s417 + $0x1] sm:$0xff] %vm389, %v381
        %419 = vst.msk [vmem:[%s417 + $0x11] sm:$0xff] %vm389, %v382
        %420 = vst.msk [vmem:[%s417 + $0x21] sm:$0xff] %vm389, %v383
        %421 = vst.msk [vmem:[%s417 + $0x31] sm:$0xff] %vm389, %v384
        %422 = vst.msk [vmem:[%s417 + $0x41] sm:$0xff] %vm389, %v385
        %423 = vst.msk [vmem:[%s417 + $0x51] sm:$0xff] %vm389, %v386
        %424 = vst.msk [vmem:[%s417 + $0x61] sm:$0xff] %vm389, %v387
        %425 = vst.msk [vmem:[%s417 + $0x71] sm:$0xff] %vm389, %v388
        %v426 = vld [vmem:[#allocation2] sm:$0xff]
        %v427 = vld [vmem:[#allocation2 + $0x10] sm:$0xff]
        %v428 = vld [vmem:[#allocation2 + $0x20] sm:$0xff]
        %v429 = vld [vmem:[#allocation2 + $0x30] sm:$0xff]
        %v430 = vld [vmem:[#allocation2 + $0x40] sm:$0xff]
        %v431 = vld [vmem:[#allocation2 + $0x50] sm:$0xff]
        %v432 = vld [vmem:[#allocation2 + $0x60] sm:$0xff]
        %v433 = vld [vmem:[#allocation2 + $0x70] sm:$0xff]
        %v434 = vld [vmem:[#allocation2 + $0x1] sm:$0xff]
        %v435 = vld [vmem:[#allocation2 + $0x11] sm:$0xff]
        %v436 = vld [vmem:[#allocation2 + $0x21] sm:$0xff]
        %v437 = vld [vmem:[#allocation2 + $0x31] sm:$0xff]
        %v438 = vld [vmem:[#allocation2 + $0x41] sm:$0xff]
        %v439 = vld [vmem:[#allocation2 + $0x51] sm:$0xff]
        %v440 = vld [vmem:[#allocation2 + $0x61] sm:$0xff]
        %v441 = vld [vmem:[#allocation2 + $0x71] sm:$0xff]
        %v442 = vld [vmem:[#allocation2 + $0x2] sm:$0xff]
        %v443 = vld [vmem:[#allocation2 + $0x12] sm:$0xff]
        %v444 = vld [vmem:[#allocation2 + $0x22] sm:$0xff]
        %v445 = vld [vmem:[#allocation2 + $0x32] sm:$0xff]
        %v446 = vld [vmem:[#allocation2 + $0x42] sm:$0xff]
        %v447 = vld [vmem:[#allocation2 + $0x52] sm:$0xff]
        %v448 = vld [vmem:[#allocation2 + $0x62] sm:$0xff]
        %v449 = vld [vmem:[#allocation2 + $0x72] sm:$0xff]
        %v450 = vld [vmem:[%s417] sm:$0xff]
        %v451 = vld [vmem:[%s417 + $0x10] sm:$0xff]
        %v452 = vld [vmem:[%s417 + $0x20] sm:$0xff]
        %v453 = vld [vmem:[%s417 + $0x30] sm:$0xff]
        %v454 = vld [vmem:[%s417 + $0x40] sm:$0xff]
        %v455 = vld [vmem:[%s417 + $0x50] sm:$0xff]
        %v456 = vld [vmem:[%s417 + $0x60] sm:$0xff]
        %v457 = vld [vmem:[%s417 + $0x70] sm:$0xff]
        %v458 = vld [vmem:[%s417 + $0x1] sm:$0xff]
        %v459 = vld [vmem:[%s417 + $0x11] sm:$0xff]
        %v460 = vld [vmem:[%s417 + $0x21] sm:$0xff]
        %v461 = vld [vmem:[%s417 + $0x31] sm:$0xff]
        %v462 = vld [vmem:[%s417 + $0x41] sm:$0xff]
        %v463 = vld [vmem:[%s417 + $0x51] sm:$0xff]
        %v464 = vld [vmem:[%s417 + $0x61] sm:$0xff]
        %v465 = vld [vmem:[%s417 + $0x71] sm:$0xff]
        %v466 = vld [vmem:[%s417 + $0x2] sm:$0xff]
        %v467 = vld [vmem:[%s417 + $0x12] sm:$0xff]
        %v468 = vld [vmem:[%s417 + $0x22] sm:$0xff]
        %v469 = vld [vmem:[%s417 + $0x32] sm:$0xff]
        %v470 = vld [vmem:[%s417 + $0x42] sm:$0xff]
        %v471 = vld [vmem:[%s417 + $0x52] sm:$0xff]
        %v472 = vld [vmem:[%s417 + $0x62] sm:$0xff]
        %v473 = vld [vmem:[%s417 + $0x72] sm:$0xff]
        %s474 = scalar_lea.vmem [#allocation2], 32
        %v475 = vld [vmem:[%s474] sm:$0xff]
        %v476 = vld [vmem:[%s474 + $0x10] sm:$0xff]
        %v477 = vld [vmem:[%s474 + $0x20] sm:$0xff]
        %v478 = vld [vmem:[%s474 + $0x30] sm:$0xff]
        %v479 = vld [vmem:[%s474 + $0x40] sm:$0xff]
        %v480 = vld [vmem:[%s474 + $0x50] sm:$0xff]
        %v481 = vld [vmem:[%s474 + $0x60] sm:$0xff]
        %v482 = vld [vmem:[%s474 + $0x70] sm:$0xff]
        %v483 = vld [vmem:[%s474 + $0x1] sm:$0xff]
        %v484 = vld [vmem:[%s474 + $0x11] sm:$0xff]
        %v485 = vld [vmem:[%s474 + $0x21] sm:$0xff]
        %v486 = vld [vmem:[%s474 + $0x31] sm:$0xff]
        %v487 = vld [vmem:[%s474 + $0x41] sm:$0xff]
        %v488 = vld [vmem:[%s474 + $0x51] sm:$0xff]
        %v489 = vld [vmem:[%s474 + $0x61] sm:$0xff]
        %v490 = vld [vmem:[%s474 + $0x71] sm:$0xff]
        %v491 = vld [vmem:[%s474 + $0x2] sm:$0xff]
        %v492 = vld [vmem:[%s474 + $0x12] sm:$0xff]
        %v493 = vld [vmem:[%s474 + $0x22] sm:$0xff]
        %v494 = vld [vmem:[%s474 + $0x32] sm:$0xff]
        %v495 = vld [vmem:[%s474 + $0x42] sm:$0xff]
        %v496 = vld [vmem:[%s474 + $0x52] sm:$0xff]
        %v497 = vld [vmem:[%s474 + $0x62] sm:$0xff]
        %v498 = vld [vmem:[%s474 + $0x72] sm:$0xff]
        %507 = vrot.lane.b32.xlu0 %v434, 8
        %v508 = vpop.permute.xlu0 %507
        %509 = vrot.lane.b32.xlu0 %v435, 8
        %v510 = vpop.permute.xlu0 %509
        %511 = vrot.lane.b32.xlu0 %v436, 8
        %v512 = vpop.permute.xlu0 %511
        %513 = vrot.lane.b32.xlu0 %v437, 8
        %v514 = vpop.permute.xlu0 %513
        %515 = vrot.lane.b32.xlu0 %v438, 8
        %v516 = vpop.permute.xlu0 %515
        %517 = vrot.lane.b32.xlu0 %v439, 8
        %v518 = vpop.permute.xlu0 %517
        %519 = vrot.lane.b32.xlu0 %v440, 8
        %v520 = vpop.permute.xlu0 %519
        %521 = vrot.lane.b32.xlu0 %v441, 8
        %v522 = vpop.permute.xlu0 %521
        %539 = vrot.lane.b32.xlu0 %v442, 16
        %v540 = vpop.permute.xlu0 %539
        %541 = vrot.lane.b32.xlu0 %v443, 16
        %v542 = vpop.permute.xlu0 %541
        %543 = vrot.lane.b32.xlu0 %v444, 16
        %v544 = vpop.permute.xlu0 %543
        %545 = vrot.lane.b32.xlu0 %v445, 16
        %v546 = vpop.permute.xlu0 %545
        %547 = vrot.lane.b32.xlu0 %v446, 16
        %v548 = vpop.permute.xlu0 %547
        %549 = vrot.lane.b32.xlu0 %v447, 16
        %v550 = vpop.permute.xlu0 %549
        %551 = vrot.lane.b32.xlu0 %v448, 16
        %v552 = vpop.permute.xlu0 %551
        %553 = vrot.lane.b32.xlu0 %v449, 16
        %v554 = vpop.permute.xlu0 %553
        %571 = vrot.lane.b32.xlu0 %v450, 24
        %v572 = vpop.permute.xlu0 %571
        %573 = vrot.lane.b32.xlu0 %v451, 24
        %v574 = vpop.permute.xlu0 %573
        %575 = vrot.lane.b32.xlu0 %v452, 24
        %v576 = vpop.permute.xlu0 %575
        %577 = vrot.lane.b32.xlu0 %v453, 24
        %v578 = vpop.permute.xlu0 %577
        %579 = vrot.lane.b32.xlu0 %v454, 24
        %v580 = vpop.permute.xlu0 %579
        %581 = vrot.lane.b32.xlu0 %v455, 24
        %v582 = vpop.permute.xlu0 %581
        %583 = vrot.lane.b32.xlu0 %v456, 24
        %v584 = vpop.permute.xlu0 %583
        %585 = vrot.lane.b32.xlu0 %v457, 24
        %v586 = vpop.permute.xlu0 %585
        %603 = vrot.lane.b32.xlu0 %v458, 32
        %v604 = vpop.permute.xlu0 %603
        %605 = vrot.lane.b32.xlu0 %v459, 32
        %v606 = vpop.permute.xlu0 %605
        %607 = vrot.lane.b32.xlu0 %v460, 32
        %v608 = vpop.permute.xlu0 %607
        %609 = vrot.lane.b32.xlu0 %v461, 32
        %v610 = vpop.permute.xlu0 %609
        %611 = vrot.lane.b32.xlu0 %v462, 32
        %v612 = vpop.permute.xlu0 %611
        %613 = vrot.lane.b32.xlu0 %v463, 32
        %v614 = vpop.permute.xlu0 %613
        %615 = vrot.lane.b32.xlu0 %v464, 32
        %v616 = vpop.permute.xlu0 %615
        %617 = vrot.lane.b32.xlu0 %v465, 32
        %v618 = vpop.permute.xlu0 %617
        %635 = vrot.lane.b32.xlu0 %v466, 40
        %v636 = vpop.permute.xlu0 %635
        %637 = vrot.lane.b32.xlu0 %v467, 40
        %v638 = vpop.permute.xlu0 %637
        %639 = vrot.lane.b32.xlu0 %v468, 40
        %v640 = vpop.permute.xlu0 %639
        %641 = vrot.lane.b32.xlu0 %v469, 40
        %v642 = vpop.permute.xlu0 %641
        %643 = vrot.lane.b32.xlu0 %v470, 40
        %v644 = vpop.permute.xlu0 %643
        %645 = vrot.lane.b32.xlu0 %v471, 40
        %v646 = vpop.permute.xlu0 %645
        %647 = vrot.lane.b32.xlu0 %v472, 40
        %v648 = vpop.permute.xlu0 %647
        %649 = vrot.lane.b32.xlu0 %v473, 40
        %v650 = vpop.permute.xlu0 %649
        %667 = vrot.lane.b32.xlu0 %v475, 48
        %v668 = vpop.permute.xlu0 %667
        %669 = vrot.lane.b32.xlu0 %v476, 48
        %v670 = vpop.permute.xlu0 %669
        %671 = vrot.lane.b32.xlu0 %v477, 48
        %v672 = vpop.permute.xlu0 %671
        %673 = vrot.lane.b32.xlu0 %v478, 48
        %v674 = vpop.permute.xlu0 %673
        %675 = vrot.lane.b32.xlu0 %v479, 48
        %v676 = vpop.permute.xlu0 %675
        %677 = vrot.lane.b32.xlu0 %v480, 48
        %v678 = vpop.permute.xlu0 %677
        %679 = vrot.lane.b32.xlu0 %v481, 48
        %v680 = vpop.permute.xlu0 %679
        %681 = vrot.lane.b32.xlu0 %v482, 48
        %v682 = vpop.permute.xlu0 %681
        %699 = vrot.lane.b32.xlu0 %v483, 56
        %v700 = vpop.permute.xlu0 %699
        %701 = vrot.lane.b32.xlu0 %v484, 56
        %v702 = vpop.permute.xlu0 %701
        %703 = vrot.lane.b32.xlu0 %v485, 56
        %v704 = vpop.permute.xlu0 %703
        %705 = vrot.lane.b32.xlu0 %v486, 56
        %v706 = vpop.permute.xlu0 %705
        %707 = vrot.lane.b32.xlu0 %v487, 56
        %v708 = vpop.permute.xlu0 %707
        %709 = vrot.lane.b32.xlu0 %v488, 56
        %v710 = vpop.permute.xlu0 %709
        %711 = vrot.lane.b32.xlu0 %v489, 56
        %v712 = vpop.permute.xlu0 %711
        %713 = vrot.lane.b32.xlu0 %v490, 56
        %v714 = vpop.permute.xlu0 %713
        %731 = vrot.lane.b32.xlu0 %v491, 64
        %v732 = vpop.permute.xlu0 %731
        %733 = vrot.lane.b32.xlu0 %v492, 64
        %v734 = vpop.permute.xlu0 %733
        %735 = vrot.lane.b32.xlu0 %v493, 64
        %v736 = vpop.permute.xlu0 %735
        %737 = vrot.lane.b32.xlu0 %v494, 64
        %v738 = vpop.permute.xlu0 %737
        %739 = vrot.lane.b32.xlu0 %v495, 64
        %v740 = vpop.permute.xlu0 %739
        %741 = vrot.lane.b32.xlu0 %v496, 64
        %v742 = vpop.permute.xlu0 %741
        %743 = vrot.lane.b32.xlu0 %v497, 64
        %v744 = vpop.permute.xlu0 %743
        %745 = vrot.lane.b32.xlu0 %v498, 64
        %v746 = vpop.permute.xlu0 %745
        %v755 = vsel %vm389, %v426, %v508
        %v756 = vsel %vm389, %v427, %v510
        %v757 = vsel %vm389, %v428, %v512
        %v758 = vsel %vm389, %v429, %v514
        %v759 = vsel %vm389, %v430, %v516
        %v760 = vsel %vm389, %v431, %v518
        %v761 = vsel %vm389, %v432, %v520
        %v762 = vsel %vm389, %v433, %v522
        %vm763 = vcmask 130048
        %v764 = vsel %vm763, %v755, %v540
        %v765 = vsel %vm763, %v756, %v542
        %v766 = vsel %vm763, %v757, %v544
        %v767 = vsel %vm763, %v758, %v546
        %v768 = vsel %vm763, %v759, %v548
        %v769 = vsel %vm763, %v760, %v550
        %v770 = vsel %vm763, %v761, %v552
        %v771 = vsel %vm763, %v762, %v554
        %vm772 = vcmask 195584
        %v773 = vsel %vm772, %v764, %v572
        %v774 = vsel %vm772, %v765, %v574
        %v775 = vsel %vm772, %v766, %v576
        %v776 = vsel %vm772, %v767, %v578
        %v777 = vsel %vm772, %v768, %v580
        %v778 = vsel %vm772, %v769, %v582
        %v779 = vsel %vm772, %v770, %v584
        %v780 = vsel %vm772, %v771, %v586
        %v781 = vsel %vm315, %v773, %v604
        %v782 = vsel %vm315, %v774, %v606
        %v783 = vsel %vm315, %v775, %v608
        %v784 = vsel %vm315, %v776, %v610
        %v785 = vsel %vm315, %v777, %v612
        %v786 = vsel %vm315, %v778, %v614
        %v787 = vsel %vm315, %v779, %v616
        %v788 = vsel %vm315, %v780, %v618
        %vm789 = vcmask 326656
        %v790 = vsel %vm789, %v781, %v636
        %v791 = vsel %vm789, %v782, %v638
        %v792 = vsel %vm789, %v783, %v640
        %v793 = vsel %vm789, %v784, %v642
        %v794 = vsel %vm789, %v785, %v644
        %v795 = vsel %vm789, %v786, %v646
        %v796 = vsel %vm789, %v787, %v648
        %v797 = vsel %vm789, %v788, %v650
        %vm798 = vcmask 392192
        %v799 = vsel %vm798, %v790, %v668
        %v800 = vsel %vm798, %v791, %v670
        %v801 = vsel %vm798, %v792, %v672
        %v802 = vsel %vm798, %v793, %v674
        %v803 = vsel %vm798, %v794, %v676
        %v804 = vsel %vm798, %v795, %v678
        %v805 = vsel %vm798, %v796, %v680
        %v806 = vsel %vm798, %v797, %v682
        %vm807 = vcmask 457728
        %v808 = vsel %vm807, %v799, %v700
        %v809 = vsel %vm807, %v800, %v702
        %v810 = vsel %vm807, %v801, %v704
        %v811 = vsel %vm807, %v802, %v706
        %v812 = vsel %vm807, %v803, %v708
        %v813 = vsel %vm807, %v804, %v710
        %v814 = vsel %vm807, %v805, %v712
        %v815 = vsel %vm807, %v806, %v714
        %vm816 = vcmask 523264
        %v817 = vsel %vm816, %v808, %v732
        %v818 = vsel %vm816, %v809, %v734
        %v819 = vsel %vm816, %v810, %v736
        %v820 = vsel %vm816, %v811, %v738
        %v821 = vsel %vm816, %v812, %v740
        %v822 = vsel %vm816, %v813, %v742
        %v823 = vsel %vm816, %v814, %v744
        %v824 = vsel %vm816, %v815, %v746
        %v825 = vld [vmem:[%s3] sm:$0xff]
        %v826 = vld [vmem:[%s3 + $0x8] sm:$0xff]
        %v827 = vld [vmem:[%s3 + $0x10] sm:$0xff]
        %v828 = vld [vmem:[%s3 + $0x18] sm:$0xff]
        %v829 = vld [vmem:[%s3 + $0x20] sm:$0xff]
        %v830 = vld [vmem:[%s3 + $0x28] sm:$0xff]
        %v831 = vld [vmem:[%s3 + $0x30] sm:$0xff]
        %v832 = vld [vmem:[%s3 + $0x38] sm:$0xff]
        %v833 = vld [vmem:[%s3 + $0x40] sm:$0xff]
        %v834 = vld [vmem:[%s4] sm:$0x1]
        %v836 = vperm.slane %v834, 0
        %vm838 = vcmask 588800
        %v840 = vsel %vm838, %v817, 0
        %v843 = vsel %vm838, %v818, 0
        %v846 = vsel %vm838, %v819, 0
        %v849 = vsel %vm838, %v820, 0
        %v852 = vsel %vm838, %v821, 0
        %v855 = vsel %vm838, %v822, 0
        %v858 = vsel %vm838, %v823, 0
        %v861 = vsel %vm838, %v824, 0
        %863 = vmatpush.msra.mxu0 0.0
        %864 = vmatpush.msra.mxu0 0.0
        %865 = vmatpush.msra.mxu0 0.0
        %866 = vmatpush.msra.mxu0 0.0
        %867 = vmatpush.msra.mxu0 0.0
        %868 = vmatpush.msra.mxu0 0.0
        %869 = vmatpush.msra.mxu0 0.0
        %870 = vmatpush.msra.mxu0 %v833
        %871 = vmatpush.msra.mxu0 %v832
        %872 = vmatpush.msra.mxu0 %v831
        %873 = vmatpush.msra.mxu0 %v830
        %874 = vmatpush.msra.mxu0 %v829
        %875 = vmatpush.msra.mxu0 %v828
        %876 = vmatpush.msra.mxu0 %v827
        %877 = vmatpush.msra.mxu0 %v826
        %878 = vmatpush.msra.mxu0 %v825
        %879 = vmatmul.f32.gmra.mxu0 %v840
        %v880 = vpop.f32.mrf.mxu0
        %v881 = vadd.f32 %v836, %v880
        %882 = vmatmul.f32.gmra.mxu0 %v843
        %v883 = vpop.f32.mrf.mxu0
        %v884 = vadd.f32 %v836, %v883
        %885 = vmatmul.f32.gmra.mxu0 %v846
        %v886 = vpop.f32.mrf.mxu0
        %v887 = vadd.f32 %v836, %v886
        %888 = vmatmul.f32.gmra.mxu0 %v849
        %v889 = vpop.f32.mrf.mxu0
        %v890 = vadd.f32 %v836, %v889
        %891 = vmatmul.f32.gmra.mxu0 %v852
        %v892 = vpop.f32.mrf.mxu0
        %v893 = vadd.f32 %v836, %v892
        %894 = vmatmul.f32.gmra.mxu0 %v855
        %v895 = vpop.f32.mrf.mxu0
        %v896 = vadd.f32 %v836, %v895
        %897 = vmatmul.f32.gmra.mxu0 %v858
        %v898 = vpop.f32.mrf.mxu0
        %v899 = vadd.f32 %v836, %v898
        %900 = vmatmul.f32.gmra.mxu0 %v861
        %v901 = vpop.f32.mrf.mxu0
        %v902 = vadd.f32 %v836, %v901
        %903 = vdwg.mxu0
        %v904 = vmax.f32 %v881, 0.0
        %v905 = vmax.f32 %v884, 0.0
        %v906 = vmax.f32 %v887, 0.0
        %v907 = vmax.f32 %v890, 0.0
        %v908 = vmax.f32 %v893, 0.0
        %v909 = vmax.f32 %v896, 0.0
        %v910 = vmax.f32 %v899, 0.0
        %v911 = vmax.f32 %v902, 0.0
        %v912 = vld [vmem:[%s5] sm:$0xff]
        %v913 = vld [vmem:[%s6] sm:$0x1]
        %v915 = vperm.slane %v913, 0
        %v918 = vsel %vm389, %v904, 0
        %v921 = vsel %vm389, %v905, 0
        %v924 = vsel %vm389, %v906, 0
        %v927 = vsel %vm389, %v907, 0
        %v930 = vsel %vm389, %v908, 0
        %v933 = vsel %vm389, %v909, 0
        %v936 = vsel %vm389, %v910, 0
        %v939 = vsel %vm389, %v911, 0
        %941 = vmatpush.msra.mxu0 0.0
        %942 = vmatpush.msra.mxu0 0.0
        %943 = vmatpush.msra.mxu0 0.0
        %944 = vmatpush.msra.mxu0 0.0
        %945 = vmatpush.msra.mxu0 0.0
        %946 = vmatpush.msra.mxu0 0.0
        %947 = vmatpush.msra.mxu0 0.0
        %948 = vmatpush.msra.mxu0 0.0
        %949 = vmatpush.msra.mxu0 0.0
        %950 = vmatpush.msra.mxu0 0.0
        %951 = vmatpush.msra.mxu0 0.0
        %952 = vmatpush.msra.mxu0 0.0
        %953 = vmatpush.msra.mxu0 0.0
        %954 = vmatpush.msra.mxu0 0.0
        %955 = vmatpush.msra.mxu0 0.0
        %956 = vmatpush.msra.mxu0 %v912
        %957 = vmatmul.f32.gmra.mxu0 %v918
        %v958 = vpop.f32.mrf.mxu0
        %v959 = vadd.f32 %v915, %v958
        %960 = vmatmul.f32.gmra.mxu0 %v921
        %v961 = vpop.f32.mrf.mxu0
        %v962 = vadd.f32 %v915, %v961
        %963 = vmatmul.f32.gmra.mxu0 %v924
        %v964 = vpop.f32.mrf.mxu0
        %v965 = vadd.f32 %v915, %v964
        %966 = vmatmul.f32.gmra.mxu0 %v927
        %v967 = vpop.f32.mrf.mxu0
        %v968 = vadd.f32 %v915, %v967
        %969 = vmatmul.f32.gmra.mxu0 %v930
        %v970 = vpop.f32.mrf.mxu0
        %v971 = vadd.f32 %v915, %v970
        %972 = vmatmul.f32.gmra.mxu0 %v933
        %v973 = vpop.f32.mrf.mxu0
        %v974 = vadd.f32 %v915, %v973
        %975 = vmatmul.f32.gmra.mxu0 %v936
        %v976 = vpop.f32.mrf.mxu0
        %v977 = vadd.f32 %v915, %v976
        %978 = vmatmul.f32.gmra.mxu0 %v939
        %v979 = vpop.f32.mrf.mxu0
        %v980 = vadd.f32 %v915, %v979
        %981 = vdwg.mxu0
        %v982 = vadd.f32 %v959, %v299
        %v983 = vadd.f32 %v962, %v300
        %v984 = vadd.f32 %v965, %v301
        %v985 = vadd.f32 %v968, %v302
        %v986 = vadd.f32 %v971, %v303
        %v987 = vadd.f32 %v974, %v304
        %v988 = vadd.f32 %v977, %v305
        %v989 = vadd.f32 %v980, %v306
        %v990 = vmax.f32 %v982, 0.0
        %v991 = vmax.f32 %v983, 0.0
        %v992 = vmax.f32 %v984, 0.0
        %v993 = vmax.f32 %v985, 0.0
        %v994 = vmax.f32 %v986, 0.0
        %v995 = vmax.f32 %v987, 0.0
        %v996 = vmax.f32 %v988, 0.0
        %v997 = vmax.f32 %v989, 0.0
        %998 = vst.msk [vmem:[%s298] sm:$0xff] %vm315, %v990
        %999 = vst.msk [vmem:[%s298 + $0x8] sm:$0xff] %vm315, %v991
        %1000 = vst.msk [vmem:[%s298 + $0x10] sm:$0xff] %vm315, %v992
        %1001 = vst.msk [vmem:[%s298 + $0x18] sm:$0xff] %vm315, %v993
        %1002 = vst.msk [vmem:[%s298 + $0x20] sm:$0xff] %vm315, %v994
        %1003 = vst.msk [vmem:[%s298 + $0x28] sm:$0xff] %vm315, %v995
        %1004 = vst.msk [vmem:[%s298 + $0x30] sm:$0xff] %vm315, %v996
        %1005 = vst.msk [vmem:[%s298 + $0x38] sm:$0xff] %vm315, %v997
        %s1006 = sand.u32 %s184, 1
        %s1007 = scalar_lea.sflag [#allocation5], %s1006
        %s1008 = sand.u32 %s184, 1
        %s1009 = smul.addr %s1008, 64
        %s1010 = scalar_lea.vmem [#allocation6], %s1009
        // Predicated region
        $region53: #{tpu_custom_call.1} parent=47 // pred_check
          %p1011 = pneg %p194
        $region54: #{tpu_custom_call.1} parent=47 // pred_check_branch
          %1013 = sbr.rel (%p1011) target = $region56
        $region55: #{tpu_custom_call.1} parent=47 // pred_region
          %1015 = vsyncadd %s1007, 0
          %s1016 = smul.addr %s24, 8
          %s1017 = smul.addr %s1016, 8
          %s1018 = scalar_lea.hbm %s7, %s1017
          %s1019 = sshll.u32 %s1010, 4
          %s1020 = int_to_ptr.vmem [resolvable:$true] %s1019
          %s1021 = sshll.u32 %s1018, 4
          %s1022 = int_to_ptr.hbm [resolvable:$true] %s1021
          %1027 = dma.vmem_to_hbm [thread:$0]  %s1020, 1024, %s1022, %s1007, 128, 128, 8
        $region56: #{tpu_custom_call.1} parent=47 // pred_fallthru
          _
      $region48: #{tpu_custom_call.1} parent=5 // pred_fallthru
        _
      %p1028 = scmp.le.s32.totalorder 2, %s19
      // Predicated region
      $region57: #{tpu_custom_call.1} parent=5 // pred_check
        %p1029 = pneg %p1028
      $region58: #{tpu_custom_call.1} parent=5 // pred_check_branch
        %1031 = sbr.rel (%p1029) target = $region60
      $region59: #{tpu_custom_call.1} parent=5 // pred_region
        %s1032 = ssub.s32 %s19, 2
        // Predicated region
        $region61: #{tpu_custom_call.1} parent=59 // pred_check
          %p1033 = pneg %p200
        $region62: #{tpu_custom_call.1} parent=59 // pred_check_branch
          %1035 = sbr.rel (%p1033) target = $region64
        $region63: #{tpu_custom_call.1} parent=59 // pred_region
          %s1036 = sand.u32 %s185, 1
          %s1037 = scalar_lea.sflag [#allocation5], %s1036
          %s1038 = sand.u32 %s185, 1
          %s1039 = smul.addr %s1038, 64
          %s1040 = scalar_lea.vmem [#allocation6], %s1039
          %1042 = dma.done %s1037, 1024
        $region64: #{tpu_custom_call.1} parent=59 // pred_fallthru
          _
      $region60: #{tpu_custom_call.1} parent=5 // pred_fallthru
        _
    $region6: #{tpu_custom_call.1} parent=1 // loop_footer
      %s23 = sadd.s32 1, %s19
    $region7: #{tpu_custom_call.1} parent=1 // loop_footer_branch
      %18 = sbr.rel target = $region3
    $region8: #{tpu_custom_call.1} parent=1 // loop_exit
      _
    %1043 = vsyncpa [#allocation4], 1
    %s1044 = scalar_lea.sflag [#allocation4], 1
    %1045 = vsyncpa %s1044, 1
    %1046 = vsyncpa [#allocation5], 1
    %s1047 = scalar_lea.sflag [#allocation5], 1
    %1048 = vsyncpa %s1047, 1

</llo_original>
